<compile_context>
chip_gen: v7x
topology: tpu7x:2x2x1
jax: 0.10.0
libtpu: 0.0.40
codegen_flags: <defaults>
</compile_context>

<pallas_src>
import functools

import jax
import jax.numpy as jnp
from jax.experimental import pallas as pl
from jax.experimental.pallas import tpu as pltpu


# ----------------------------------------------------------------------------
# Kernels (x tile is (nb, Cin, thw): channels on sublanes, spatial on lanes)
# ----------------------------------------------------------------------------
def _adaptor_kernel(x_ref, wd_ref, bd_ref, wu_ref, bu_ref, o_ref, *, nb):
    """identity = x (no proj): out = x + up(relu(down(x)))."""
    wd = wd_ref[...]
    bd = bd_ref[...]
    wu = wu_ref[...]
    bu = bu_ref[...]
    for b in range(nb):                                   # static, small
        x = x_ref[b]                                      # (Cin, thw), native dtype
        h = jnp.dot(wd, x, preferred_element_type=jnp.float32) + bd
        h = jnp.maximum(h, 0.0)                           # ReLU (f32)
        up = jnp.dot(wu, h.astype(wu.dtype),
                     preferred_element_type=jnp.float32) + bu
        # residual add in the output dtype: no f32 copy of the x tile
        o_ref[b] = x + up.astype(o_ref.dtype)


def _adaptor_proj_kernel(x_ref, w1_ref, b1_ref, wu_ref, bu_ref, o_ref, *, nb, chp):
    """identity = proj(x); proj and down_proj fused into one matmul (w1)."""
    w1 = w1_ref[...]
    b1 = b1_ref[...]
    wu = wu_ref[...]
    bu = bu_ref[...]
    for b in range(nb):
        x = x_ref[b]                                      # (Cin, thw)
        y1 = jnp.dot(w1, x, preferred_element_type=jnp.float32) + b1
        h = jnp.maximum(y1[:chp], 0.0)                    # (Chp, thw)  f32
        ident = y1[chp:]                                  # (Cout, thw) f32
        up = jnp.dot(wu, h.astype(wu.dtype),
                     preferred_element_type=jnp.float32) + bu
        o_ref[b] = (ident + up).astype(o_ref.dtype)


# ----------------------------------------------------------------------------
# Hardware / tile-size heuristics (mem-bound: biggest legal lane tile in VMEM)
# ----------------------------------------------------------------------------
def _vmem_capacity_bytes():
    """Physical VMEM capacity; conservative (v7x) fallback if unknown."""
    try:
        info = pltpu.get_tpu_info()
        cap = getattr(info, "vmem_capacity_bytes", None)
        if cap:
            return int(cap)
    except Exception:
        pass
    return 64 << 20


def _pick_thw(hw, col_bytes, budget):
    """Largest multiple-of-128 divisor of hw whose per-column cost (double-
    buffered x/out tiles + f32 intermediates) fits `budget`.  Falls back to
    the full extent (always a legal block) when hw is not a 128-multiple."""
    if hw % 128 != 0:
        return hw
    cap = min(hw, max(128, (budget // max(col_bytes, 1)) // 128 * 128))
    for t in range(cap, 127, -128):
        if hw % t == 0:
            return t
    return hw


def _pick_nb(n, per_img_x_bytes, per_img_step_bytes, budget):
    """Images per grid step (only used when the HW tile covers the full row,
    i.e. the per-step DMA stays contiguous).  Grows nb until ~1 MiB of x is
    moved per step (amortizes the ~600-cycle per-step overhead), capped by the
    VMEM budget; keeps >= 2 total steps when the problem is big enough to be
    worth splitting across v7x's two TensorCores."""
    target = 1 << 20
    nb = 1
    for cand in range(1, n + 1):
        if n % cand:
            continue
        if cand * per_img_step_bytes > budget:
            break
        steps = n // cand
        if steps < 2 and n * per_img_x_bytes >= 2 * target:
            break                      # big problem: keep >=2 steps (megacore)
        nb = cand
        if cand * per_img_x_bytes >= target:
            break                      # per-step DMA already large enough
    return nb


# ----------------------------------------------------------------------------
# Wrapper
# ----------------------------------------------------------------------------
def lightweight_adaptor(x_nchw, params, *, vmem_budget_bytes=None):
    """Apply LightweightAdaptor.forward on an NCHW input.

    params (torch 1x1-conv layout, i.e. weight[:, :, 0, 0]):
      'wd' (Ch, Cin), 'bd' (Ch,), 'wu' (Cout, Ch), 'bu' (Cout,)
      optionally 'wp' (Cout, Cin), 'bp' (Cout,) when Cin != Cout.
    """
    N, Cin, H, W = x_nchw.shape
    HW = H * W
    act_dtype = x_nchw.dtype
    itemsize = jnp.dtype(act_dtype).itemsize

    wd, bd = params["wd"], params["bd"]
    wu, bu = params["wu"], params["bu"]
    Ch = wd.shape[0]
    Cout = wu.shape[0]
    has_proj = "wp" in params

    # Pad hidden dim to a sublane multiple of 8 (zero rows/cols -> exact math,
    # and the fused-matmul split in the proj kernel stays sublane-aligned).
    Chp = max(8, ((Ch + 7) // 8) * 8)
    # Weights in the activation dtype (keep the MXU on the fast bf16 path when
    # x is bf16; no silent f32 promotion of the big x tile).  Biases in f32:
    # they are added to the f32 accumulator.
    wd_p = jnp.zeros((Chp, Cin), act_dtype).at[:Ch].set(wd.astype(act_dtype))
    bd_p = jnp.zeros((Chp,), jnp.float32).at[:Ch].set(bd.astype(jnp.float32))
    wu_p = jnp.zeros((Cout, Chp), act_dtype).at[:, :Ch].set(wu.astype(act_dtype))
    bu2 = bu.astype(jnp.float32).reshape(Cout, 1)

    # Free reshape: channels stay where they are, H*W becomes the lane axis.
    x3d = x_nchw.reshape(N, Cin, HW)

    # Per-lane-column VMEM cost per image: double-buffered x + out tiles in the
    # activation dtype, plus the single-buffered f32 intermediates
    # (h / up / fused y1 / ident) the kernel materializes in scratch.
    col_bytes = 2 * (Cin + Cout) * itemsize + (2 * Chp + 2 * Cout) * 4

    cap = _vmem_capacity_bytes()
    budget = vmem_budget_bytes if vmem_budget_bytes is not None else int(cap * 0.35)

    thw = _pick_thw(HW, col_bytes, budget)
    nb = 1
    if thw == HW and N > 1:
        nb = _pick_nb(N, Cin * HW * itemsize, HW * col_bytes, budget)
    grid = (N // nb, HW // thw)

    x_spec = pl.BlockSpec((nb, Cin, thw), lambda n, s: (n, 0, s))
    out_spec = pl.BlockSpec((nb, Cout, thw), lambda n, s: (n, 0, s))
    full2d = lambda a: pl.BlockSpec(a.shape, lambda n, s: (0, 0))

    M = N * HW
    if has_proj:
        wp, bp = params["wp"], params["bp"]
        # Fuse down_proj and proj: one (Chp+Cout, Cin) @ (Cin, thw) matmul.
        w1 = jnp.concatenate([wd_p, wp.astype(act_dtype)], axis=0)
        b1 = jnp.concatenate([bd_p, bp.astype(jnp.float32)], axis=0)
        b1 = b1.reshape(Chp + Cout, 1)
        kernel = functools.partial(_adaptor_proj_kernel, nb=nb, chp=Chp)
        args = (x3d, w1, b1, wu_p, bu2)
        in_specs = [x_spec, full2d(w1), full2d(b1), full2d(wu_p), full2d(bu2)]
        flops = 2 * M * Cin * (Chp + Cout) + 2 * M * Chp * Cout + 2 * M * Cout
    else:
        bd2 = bd_p.reshape(Chp, 1)
        kernel = functools.partial(_adaptor_kernel, nb=nb)
        args = (x3d, wd_p, bd2, wu_p, bu2)
        in_specs = [x_spec, full2d(wd_p), full2d(bd2), full2d(wu_p), full2d(bu2)]
        flops = 2 * M * Cin * Chp + 2 * M * Chp * Cout + 2 * M * Cout

    weight_bytes = sum(int(a.size) * a.dtype.itemsize for a in args[1:])
    bytes_accessed = x3d.size * itemsize + M * Cout * itemsize + weight_bytes

    # Explicit scoped-VMEM limit sized for the chosen tiling (tiles +
    # intermediates + resident weights + margin), capped below physical VMEM.
    need = nb * thw * col_bytes + 2 * weight_bytes + (2 << 20)
    vmem_limit = int(min(cap * 0.95, max(need, 32 << 20)))

    out3d = pl.pallas_call(
        kernel,
        out_shape=jax.ShapeDtypeStruct((N, Cout, HW), act_dtype),
        grid_spec=pltpu.PrefetchScalarGridSpec(
            num_scalar_prefetch=0,
            grid=grid,
            in_specs=in_specs,
            out_specs=out_spec,
        ),
        compiler_params=pltpu.CompilerParams(
            dimension_semantics=("parallel", "parallel"),
            vmem_limit_bytes=vmem_limit),
        cost_estimate=pl.CostEstimate(
            flops=flops, transcendentals=0, bytes_accessed=bytes_accessed),
    )(*args)

    # Free reshape back to NCHW (no transpose, no extra HBM pass).
    return out3d.reshape(N, Cout, H, W)


# ----------------------------------------------------------------------------
# Pure-JAX reference (mirrors the PyTorch forward exactly)
# ----------------------------------------------------------------------------
def reference_adaptor(x_nchw, params):
    N, Cin, H, W = x_nchw.shape
    x2d = jnp.transpose(x_nchw, (0, 2, 3, 1)).reshape(-1, Cin)       # (M, Cin)
    if "wp" in params:
        ident = x2d @ params["wp"].T + params["bp"]
    else:
        ident = x2d
    h = jnp.maximum(x2d @ params["wd"].T + params["bd"], 0.0)
    up = h @ params["wu"].T + params["bu"]
    out2d = ident + up
    Cout = out2d.shape[-1]
    return out2d.reshape(N, H, W, Cout).transpose(0, 3, 1, 2)


# ----------------------------------------------------------------------------
# Parameter construction (deterministic; torch conv-weight layout (Cout, Cin))
# ----------------------------------------------------------------------------
def make_params(key, in_channels, out_channels=None, reduction_ratio=32,
                dtype=jnp.float32):
    out_channels = out_channels or in_channels
    hidden = max(1, in_channels // reduction_ratio)
    ks = jax.random.split(key, 6)
    params = {
        "wd": jax.random.normal(ks[0], (hidden, in_channels), dtype) * 0.1,
        "bd": jax.random.normal(ks[1], (hidden,), dtype) * 0.1,
        # PyTorch zero-inits up_proj; random here to exercise the kernel.
        "wu": jax.random.normal(ks[2], (out_channels, hidden), dtype) * 0.1,
        "bu": jax.random.normal(ks[3], (out_channels,), dtype) * 0.1,
    }
    if in_channels != out_channels:
        # PyTorch zero-inits proj; random here to exercise the kernel.
        params["wp"] = jax.random.normal(ks[4], (out_channels, in_channels), dtype) * 0.1
        params["bp"] = jax.random.normal(ks[5], (out_channels,), dtype) * 0.1
    return params


if __name__ == "__main__":
    key = jax.random.PRNGKey(0)
    kx, kp1, kp2 = jax.random.split(key, 3)

    N, Cin, H, W = 2, 64, 16, 16
    x = jax.random.normal(kx, (N, Cin, H, W), jnp.float32)

    # Case 1: in_channels == out_channels (proj is None), hidden = 64 // 32 = 2
    p1 = make_params(kp1, Cin)
    y1 = lightweight_adaptor(x, p1)
    jax.block_until_ready(y1)
    r1 = reference_adaptor(x, p1)
    assert y1.shape == (N, Cin, H, W)
    assert jnp.allclose(y1, r1, atol=1e-4, rtol=1e-4)

    # Case 2: in_channels != out_channels (proj path, fused proj+down matmul)
    Cout = 32
    p2 = make_params(kp2, Cin, out_channels=Cout)
    y2 = lightweight_adaptor(x, p2)
    jax.block_until_ready(y2)
    r2 = reference_adaptor(x, p2)
    assert y2.shape == (N, Cout, H, W)
    assert jnp.allclose(y2, r2, atol=1e-4, rtol=1e-4)

    print("KERNEL_OK")
</pallas_src>

<mosaic_0001>
module attributes {stable_mosaic.version = 11 : i64} {
  func.func @_adaptor_kernel(%arg0: i32, %arg1: i32, %arg2: memref<2x64x256xf32, #tpu.memory_space<vmem>>, %arg3: memref<8x64xf32, #tpu.memory_space<vmem>>, %arg4: memref<8x1xf32, #tpu.memory_space<vmem>>, %arg5: memref<64x8xf32, #tpu.memory_space<vmem>>, %arg6: memref<64x1xf32, #tpu.memory_space<vmem>>, %arg7: memref<2x64x256xf32, #tpu.memory_space<vmem>>) attributes {dimension_semantics = [#tpu.dimension_semantics<parallel>, #tpu.dimension_semantics<parallel>], iteration_bounds = array<i64: 1, 1>, scalar_prefetch = 0 : i64, scratch_operands = 0 : i64, tpu.core_type = #tpu.core_type<tc>, window_params = [{transform_indices = @transform_0, window_bounds = array<i64: 2, 64, 256>}, {pipeline_mode = #tpu.pipeline_mode<synchronous>, transform_indices = @transform_1, window_bounds = array<i64: 8, 64>}, {pipeline_mode = #tpu.pipeline_mode<synchronous>, transform_indices = @transform_2, window_bounds = array<i64: 8, 1>}, {pipeline_mode = #tpu.pipeline_mode<synchronous>, transform_indices = @transform_3, window_bounds = array<i64: 64, 8>}, {pipeline_mode = #tpu.pipeline_mode<synchronous>, transform_indices = @transform_4, window_bounds = array<i64: 64, 1>}, {transform_indices = @transform_5, window_bounds = array<i64: 2, 64, 256>}]} {
    %c0 = arith.constant 0 : index
    %c0_0 = arith.constant 0 : index
    %0 = vector.load %arg3[%c0, %c0_0] : memref<8x64xf32, #tpu.memory_space<vmem>>, vector<8x64xf32>
    %c0_1 = arith.constant 0 : index
    %c0_2 = arith.constant 0 : index
    %1 = vector.load %arg4[%c0_1, %c0_2] : memref<8x1xf32, #tpu.memory_space<vmem>>, vector<8x1xf32>
    %c0_3 = arith.constant 0 : index
    %c0_4 = arith.constant 0 : index
    %2 = vector.load %arg5[%c0_3, %c0_4] : memref<64x8xf32, #tpu.memory_space<vmem>>, vector<64x8xf32>
    %c0_5 = arith.constant 0 : index
    %c0_6 = arith.constant 0 : index
    %3 = vector.load %arg6[%c0_5, %c0_6] : memref<64x1xf32, #tpu.memory_space<vmem>>, vector<64x1xf32>
    %c0_7 = arith.constant 0 : index
    %c0_8 = arith.constant 0 : index
    %c0_9 = arith.constant 0 : index
    %4 = vector.load %arg2[%c0_7, %c0_8, %c0_9] : memref<2x64x256xf32, #tpu.memory_space<vmem>>, vector<1x64x256xf32>
    %5 = vector.shape_cast %4 : vector<1x64x256xf32> to vector<64x256xf32>
    %cst = arith.constant dense<0.000000e+00> : vector<8x256xf32>
    %6 = tpu.matmul %0, %5, %cst {dimension_numbers = #tpu.dot_dimension_numbers<[1], [0], [0], [1], [0, 0, 1, 1], [], []>} : vector<8x64xf32>, vector<64x256xf32>, vector<8x256xf32> -> vector<8x256xf32>
    %7 = vector.broadcast %1 : vector<8x1xf32> to vector<8x256xf32>
    %8 = arith.addf %6, %7 : vector<8x256xf32>
    %cst_10 = arith.constant 0.000000e+00 : f32
    %9 = vector.broadcast %cst_10 : f32 to vector<8x256xf32>
    %10 = arith.maximumf %8, %9 : vector<8x256xf32>
    %cst_11 = arith.constant dense<0.000000e+00> : vector<64x256xf32>
    %11 = tpu.matmul %2, %10, %cst_11 {dimension_numbers = #tpu.dot_dimension_numbers<[1], [0], [0], [1], [0, 0, 1, 1], [], []>} : vector<64x8xf32>, vector<8x256xf32>, vector<64x256xf32> -> vector<64x256xf32>
    %12 = vector.broadcast %3 : vector<64x1xf32> to vector<64x256xf32>
    %13 = arith.addf %11, %12 : vector<64x256xf32>
    %14 = arith.addf %5, %13 : vector<64x256xf32>
    %c0_12 = arith.constant 0 : index
    %c0_13 = arith.constant 0 : index
    %c0_14 = arith.constant 0 : index
    %15 = vector.load %arg7[%c0_12, %c0_13, %c0_14] : memref<2x64x256xf32, #tpu.memory_space<vmem>>, vector<1x64x256xf32>
    %16 = vector.shape_cast %15 : vector<1x64x256xf32> to vector<64x256xf32>
    %17 = vector.shape_cast %14 : vector<64x256xf32> to vector<1x64x256xf32>
    tpu.vector_store %arg7[%c0_12, %c0_13, %c0_14], %17 {strides = array<i32>} : memref<2x64x256xf32, #tpu.memory_space<vmem>>, vector<1x64x256xf32>,
    %c1 = arith.constant 1 : index
    %c0_15 = arith.constant 0 : index
    %c0_16 = arith.constant 0 : index
    %18 = vector.load %arg2[%c1, %c0_15, %c0_16] : memref<2x64x256xf32, #tpu.memory_space<vmem>>, vector<1x64x256xf32>
    %19 = vector.shape_cast %18 : vector<1x64x256xf32> to vector<64x256xf32>
    %cst_17 = arith.constant dense<0.000000e+00> : vector<8x256xf32>
    %20 = tpu.matmul %0, %19, %cst_17 {dimension_numbers = #tpu.dot_dimension_numbers<[1], [0], [0], [1], [0, 0, 1, 1], [], []>} : vector<8x64xf32>, vector<64x256xf32>, vector<8x256xf32> -> vector<8x256xf32>
    %21 = vector.broadcast %1 : vector<8x1xf32> to vector<8x256xf32>
    %22 = arith.addf %20, %21 : vector<8x256xf32>
    %cst_18 = arith.constant 0.000000e+00 : f32
    %23 = vector.broadcast %cst_18 : f32 to vector<8x256xf32>
    %24 = arith.maximumf %22, %23 : vector<8x256xf32>
    %cst_19 = arith.constant dense<0.000000e+00> : vector<64x256xf32>
    %25 = tpu.matmul %2, %24, %cst_19 {dimension_numbers = #tpu.dot_dimension_numbers<[1], [0], [0], [1], [0, 0, 1, 1], [], []>} : vector<64x8xf32>, vector<8x256xf32>, vector<64x256xf32> -> vector<64x256xf32>
    %26 = vector.broadcast %3 : vector<64x1xf32> to vector<64x256xf32>
    %27 = arith.addf %25, %26 : vector<64x256xf32>
    %28 = arith.addf %19, %27 : vector<64x256xf32>
    %c1_20 = arith.constant 1 : index
    %c0_21 = arith.constant 0 : index
    %c0_22 = arith.constant 0 : index
    %29 = vector.load %arg7[%c1_20, %c0_21, %c0_22] : memref<2x64x256xf32, #tpu.memory_space<vmem>>, vector<1x64x256xf32>
    %30 = vector.shape_cast %29 : vector<1x64x256xf32> to vector<64x256xf32>
    %31 = vector.shape_cast %28 : vector<64x256xf32> to vector<1x64x256xf32>
    tpu.vector_store %arg7[%c1_20, %c0_21, %c0_22], %31 {strides = array<i32>} : memref<2x64x256xf32, #tpu.memory_space<vmem>>, vector<1x64x256xf32>,
    return
  }
  func.func @transform_0(%arg0: i32, %arg1: i32) -> (i32, i32, i32) {
    %c0_i32 = arith.constant 0 : i32
    %c0_i32_0 = arith.constant 0 : i32
    return %arg0, %c0_i32, %arg1 : i32, i32, i32
  }
  func.func @transform_1(%arg0: i32, %arg1: i32) -> (i32, i32) {
    %c0_i32 = arith.constant 0 : i32
    %c0_i32_0 = arith.constant 0 : i32
    %c0_i32_1 = arith.constant 0 : i32
    return %c0_i32, %c0_i32_0 : i32, i32
  }
  func.func @transform_2(%arg0: i32, %arg1: i32) -> (i32, i32) {
    %c0_i32 = arith.constant 0 : i32
    %c0_i32_0 = arith.constant 0 : i32
    %c0_i32_1 = arith.constant 0 : i32
    return %c0_i32, %c0_i32_0 : i32, i32
  }
  func.func @transform_3(%arg0: i32, %arg1: i32) -> (i32, i32) {
    %c0_i32 = arith.constant 0 : i32
    %c0_i32_0 = arith.constant 0 : i32
    %c0_i32_1 = arith.constant 0 : i32
    return %c0_i32, %c0_i32_0 : i32, i32
  }
  func.func @transform_4(%arg0: i32, %arg1: i32) -> (i32, i32) {
    %c0_i32 = arith.constant 0 : i32
    %c0_i32_0 = arith.constant 0 : i32
    %c0_i32_1 = arith.constant 0 : i32
    return %c0_i32, %c0_i32_0 : i32, i32
  }
  func.func @transform_5(%arg0: i32, %arg1: i32) -> (i32, i32, i32) {
    %c0_i32 = arith.constant 0 : i32
    %c0_i32_0 = arith.constant 0 : i32
    return %arg0, %c0_i32, %arg1 : i32, i32, i32
  }
}

</mosaic_0001>

<llo_original>
// kernel: tpu_custom_call.1
$region0: #{tpu_custom_call.1}
  #allocation0 [shape = 'u32[]', space=smem, size = 0x4, offset = 0x4, fixed_abs, tag = 'smem constant byte address 0x4 - core index']
  #allocation1 [shape = 'u32[144,128]{1,0:T(1,128)}', space=vmem, size = 0x12000, scoped, tag = 'internal scratch']
  %s0 = inlined_call_operand.hbm [shape: f32[2,64,256], index: 0, kind: input, shape index: {}]
  %s1 = inlined_call_operand.vmem [shape: f32[8,64], index: 1, kind: input, shape index: {}]
  %s2 = inlined_call_operand.vmem [shape: f32[8,1], index: 2, kind: input, shape index: {}]
  %s3 = inlined_call_operand.vmem [shape: f32[64,8], index: 3, kind: input, shape index: {}]
  %s4 = inlined_call_operand.vmem [shape: f32[64,1], index: 4, kind: input, shape index: {}]
  %s5 = inlined_call_operand.hbm [shape: f32[2,64,256], index: 5, kind: output, shape index: {}]
  %s6 = sld [smem:[#allocation0]]
  $region34: #{tpu_custom_call.1} parent=0
    _
  %s8 = ssub.s32 1, %s6
  %s9 = scalar_select 0, %s8, %s6
  $region1: #{tpu_custom_call.1} parent=0
    #allocation2 [shape = 'u8[131072]{0}', space=vmem, size = 0x20000, scoped, tag = 'input window, operand 0, single buffered']
    #allocation3 [shape = 's32[1]{0}', space=sflag, size = 0x4, scoped, tag = 'scoped memory for tpu_custom_call.1']
    #allocation4 [shape = 's32[1]{0}', space=sflag, size = 0x4, scoped, tag = 'scoped memory for tpu_custom_call.1']
    #allocation5 [shape = 'u8[131072]{0}', space=vmem, size = 0x20000, scoped, tag = 'output window, operand 0, single buffered']
    %10 = vsyncpa [#allocation3], 0
    %11 = vsyncpa [#allocation4], 0
    // Predicated region
    $region2: #{tpu_custom_call.1} parent=1 // pred_check
      _
    $region3: #{tpu_custom_call.1} parent=1 // pred_check_branch
      %13 = sbr.rel (0) target = $region5
    $region4: #{tpu_custom_call.1} parent=1 // pred_region
      %s15 = ssub.s32 4096, 4096
      %16 = vsyncadd [#allocation3], %s15
      %s17 = sshll.u32 [#allocation2], 4
      %s18 = int_to_ptr.vmem [resolvable:$true] %s17
      %23 = dma.hbm_to_vmem [thread:$0]  %s0, 4096, %s18, [#allocation3], 256, 256, 16
    $region5: #{tpu_custom_call.1} parent=1 // pred_fallthru
      _
    // Predicated region
    $region6: #{tpu_custom_call.1} parent=1 // pred_check
      _
    $region7: #{tpu_custom_call.1} parent=1 // pred_check_branch
      %25 = sbr.rel (0) target = $region9
    $region8: #{tpu_custom_call.1} parent=1 // pred_region
      _
    $region9: #{tpu_custom_call.1} parent=1 // pred_fallthru
      _
    // Predicated region
    $region10: #{tpu_custom_call.1} parent=1 // pred_check
      _
    $region11: #{tpu_custom_call.1} parent=1 // pred_check_branch
      %27 = sbr.rel (0) target = $region13
    $region12: #{tpu_custom_call.1} parent=1 // pred_region
      _
    $region13: #{tpu_custom_call.1} parent=1 // pred_fallthru
      _
    // Predicated region
    $region14: #{tpu_custom_call.1} parent=1 // pred_check
      _
    $region15: #{tpu_custom_call.1} parent=1 // pred_check_branch
      %29 = sbr.rel (0) target = $region17
    $region16: #{tpu_custom_call.1} parent=1 // pred_region
      _
    $region17: #{tpu_custom_call.1} parent=1 // pred_fallthru
      _
    // Predicated region
    $region18: #{tpu_custom_call.1} parent=1 // pred_check
      _
    $region19: #{tpu_custom_call.1} parent=1 // pred_check_branch
      %31 = sbr.rel (0) target = $region21
    $region20: #{tpu_custom_call.1} parent=1 // pred_region
      _
    $region21: #{tpu_custom_call.1} parent=1 // pred_fallthru
      _
    // Predicated region
    $region22: #{tpu_custom_call.1} parent=1 // pred_check
      _
    $region23: #{tpu_custom_call.1} parent=1 // pred_check_branch
      %33 = sbr.rel (0) target = $region25
    $region24: #{tpu_custom_call.1} parent=1 // pred_region
      %34 = dma.done [#allocation3], 4096
    $region25: #{tpu_custom_call.1} parent=1 // pred_fallthru
      _
    %v35 = vld [vmem:[%s1] sm:$0xff]
    %v36 = vld [vmem:[%s2] sm:$0xff]
    %v37 = vld [vmem:[%s3] sm:$0xff]
    %v38 = vld [vmem:[%s3 + $0x8] sm:$0xff]
    %v39 = vld [vmem:[%s3 + $0x10] sm:$0xff]
    %v40 = vld [vmem:[%s3 + $0x18] sm:$0xff]
    %v41 = vld [vmem:[%s3 + $0x20] sm:$0xff]
    %v42 = vld [vmem:[%s3 + $0x28] sm:$0xff]
    %v43 = vld [vmem:[%s3 + $0x30] sm:$0xff]
    %v44 = vld [vmem:[%s3 + $0x38] sm:$0xff]
    %v45 = vld [vmem:[%s4] sm:$0xff]
    %v46 = vld [vmem:[%s4 + $0x8] sm:$0xff]
    %v47 = vld [vmem:[%s4 + $0x10] sm:$0xff]
    %v48 = vld [vmem:[%s4 + $0x18] sm:$0xff]
    %v49 = vld [vmem:[%s4 + $0x20] sm:$0xff]
    %v50 = vld [vmem:[%s4 + $0x28] sm:$0xff]
    %v51 = vld [vmem:[%s4 + $0x30] sm:$0xff]
    %v52 = vld [vmem:[%s4 + $0x38] sm:$0xff]
    %v53 = vld [vmem:[#allocation2] sm:$0xff]
    %v54 = vld [vmem:[#allocation2 + $0x8] sm:$0xff]
    %v55 = vld [vmem:[#allocation2 + $0x10] sm:$0xff]
    %v56 = vld [vmem:[#allocation2 + $0x18] sm:$0xff]
    %v57 = vld [vmem:[#allocation2 + $0x20] sm:$0xff]
    %v58 = vld [vmem:[#allocation2 + $0x28] sm:$0xff]
    %v59 = vld [vmem:[#allocation2 + $0x30] sm:$0xff]
    %v60 = vld [vmem:[#allocation2 + $0x38] sm:$0xff]
    %v61 = vld [vmem:[#allocation2 + $0x40] sm:$0xff]
    %v62 = vld [vmem:[#allocation2 + $0x48] sm:$0xff]
    %v63 = vld [vmem:[#allocation2 + $0x50] sm:$0xff]
    %v64 = vld [vmem:[#allocation2 + $0x58] sm:$0xff]
    %v65 = vld [vmem:[#allocation2 + $0x60] sm:$0xff]
    %v66 = vld [vmem:[#allocation2 + $0x68] sm:$0xff]
    %v67 = vld [vmem:[#allocation2 + $0x70] sm:$0xff]
    %v68 = vld [vmem:[#allocation2 + $0x78] sm:$0xff]
    %70 = vset.pattern.permute.xlu0 0
    %71 = vperm.xlu0 %70, %v36
    %v72 = vpop.permute.xlu0 %71
    %vm74 = vcmask 523264
    %v76 = vsel %vm74, %v35, 0
    %78 = vmatprep.subr.mxu0 %v54
    %79 = vmatpush1.msra.mxu0 %v53
    %80 = vmatprep.subr.mxu0 %v56
    %81 = vmatpush1.msra.mxu0 %v55
    %82 = vmatprep.subr.mxu0 %v58
    %83 = vmatpush1.msra.mxu0 %v57
    %84 = vmatprep.subr.mxu0 %v60
    %85 = vmatpush1.msra.mxu0 %v59
    %86 = vmatprep.subr.mxu0 %v62
    %87 = vmatpush1.msra.mxu0 %v61
    %88 = vmatprep.subr.mxu0 %v64
    %89 = vmatpush1.msra.mxu0 %v63
    %90 = vmatprep.subr.mxu0 %v66
    %91 = vmatpush1.msra.mxu0 %v65
    %92 = vmatprep.subr.mxu0 %v68
    %93 = vmatpush1.msra.mxu0 %v67
    %94 = vmatprep.subr.mxu0 0.0
    %95 = vmatpush1.msra.mxu0 0.0
    %96 = vmatprep.subr.mxu0 0.0
    %97 = vmatpush1.msra.mxu0 0.0
    %98 = vmatprep.subr.mxu0 0.0
    %99 = vmatpush1.msra.mxu0 0.0
    %100 = vmatprep.subr.mxu0 0.0
    %101 = vmatpush1.msra.mxu0 0.0
    %102 = vmatprep.subr.mxu0 0.0
    %103 = vmatpush1.msra.mxu0 0.0
    %104 = vmatprep.subr.mxu0 0.0
    %105 = vmatpush1.msra.mxu0 0.0
    %106 = vmatprep.subr.mxu0 0.0
    %107 = vmatpush1.msra.mxu0 0.0
    %108 = vmatprep.subr.mxu0 0.0
    %109 = vmatpush1.msra.mxu0 0.0
    %110 = vmatprep.subr.mxu0 0.0
    %111 = vmatpush1.msra.mxu0 0.0
    %112 = vmatprep.subr.mxu0 0.0
    %113 = vmatpush1.msra.mxu0 0.0
    %114 = vmatprep.subr.mxu0 0.0
    %115 = vmatpush1.msra.mxu0 0.0
    %116 = vmatprep.subr.mxu0 0.0
    %117 = vmatpush1.msra.mxu0 0.0
    %118 = vmatprep.subr.mxu0 0.0
    %119 = vmatpush1.msra.mxu0 0.0
    %120 = vmatprep.subr.mxu0 0.0
    %121 = vmatpush1.msra.mxu0 0.0
    %122 = vmatprep.subr.mxu0 0.0
    %123 = vmatpush1.msra.mxu0 0.0
    %124 = vmatprep.subr.mxu0 0.0
    %125 = vmatpush1.msra.mxu0 0.0
    %126 = vmatprep.subr.mxu0 0.0
    %127 = vmatpush1.msra.mxu0 0.0
    %128 = vmatprep.subr.mxu0 0.0
    %129 = vmatpush1.msra.mxu0 0.0
    %130 = vmatprep.subr.mxu0 0.0
    %131 = vmatpush1.msra.mxu0 0.0
    %132 = vmatprep.subr.mxu0 0.0
    %133 = vmatpush1.msra.mxu0 0.0
    %134 = vmatprep.subr.mxu0 0.0
    %135 = vmatpush1.msra.mxu0 0.0
    %136 = vmatprep.subr.mxu0 0.0
    %137 = vmatpush1.msra.mxu0 0.0
    %138 = vmatprep.subr.mxu0 0.0
    %139 = vmatpush1.msra.mxu0 0.0
    %140 = vmatprep.subr.mxu0 0.0
    %141 = vmatpush1.msra.mxu0 0.0
    %142 = vmatprep.mubr.f32.mxu0 0.0
    %143 = vmatmul.mubr.f32.gmra.mrb[0].mxu0 %v76
    %v144 = vpop.f32.mrb[0].mxu0
    %v145 = vadd.f32 %v72, %v144
    %v146 = vpop.f32.mrb[0].mxu0
    %v147 = vadd.f32 %v72, %v146
    %148 = vdwg.mxu0
    %v149 = vmax.f32 %v145, 0.0
    %v150 = vmax.f32 %v147, 0.0
    %152 = vset.pattern.permute.xlu0 0
    %153 = vperm.xlu0 %152, %v45
    %v154 = vpop.permute.xlu0 %153
    %157 = vset.pattern.permute.xlu0 0
    %158 = vperm.xlu0 %157, %v46
    %v159 = vpop.permute.xlu0 %158
    %162 = vset.pattern.permute.xlu0 0
    %163 = vperm.xlu0 %162, %v47
    %v164 = vpop.permute.xlu0 %163
    %167 = vset.pattern.permute.xlu0 0
    %168 = vperm.xlu0 %167, %v48
    %v169 = vpop.permute.xlu0 %168
    %172 = vset.pattern.permute.xlu0 0
    %173 = vperm.xlu0 %172, %v49
    %v174 = vpop.permute.xlu0 %173
    %177 = vset.pattern.permute.xlu0 0
    %178 = vperm.xlu0 %177, %v50
    %v179 = vpop.permute.xlu0 %178
    %182 = vset.pattern.permute.xlu0 0
    %183 = vperm.xlu0 %182, %v51
    %v184 = vpop.permute.xlu0 %183
    %187 = vset.pattern.permute.xlu0 0
    %188 = vperm.xlu0 %187, %v52
    %v189 = vpop.permute.xlu0 %188
    %vm191 = vcmask 64512
    %v193 = vsel %vm191, %v37, 0
    %v196 = vsel %vm191, %v38, 0
    %v199 = vsel %vm191, %v39, 0
    %v202 = vsel %vm191, %v40, 0
    %v205 = vsel %vm191, %v41, 0
    %v208 = vsel %vm191, %v42, 0
    %v211 = vsel %vm191, %v43, 0
    %v214 = vsel %vm191, %v44, 0
    %216 = vmatprep.subr.mxu0 %v150
    %217 = vmatpush1.msra.mxu0 %v149
    %218 = vmatprep.subr.mxu0 0.0
    %219 = vmatpush1.msra.mxu0 0.0
    %220 = vmatprep.subr.mxu0 0.0
    %221 = vmatpush1.msra.mxu0 0.0
    %222 = vmatprep.subr.mxu0 0.0
    %223 = vmatpush1.msra.mxu0 0.0
    %224 = vmatprep.subr.mxu0 0.0
    %225 = vmatpush1.msra.mxu0 0.0
    %226 = vmatprep.subr.mxu0 0.0
    %227 = vmatpush1.msra.mxu0 0.0
    %228 = vmatprep.subr.mxu0 0.0
    %229 = vmatpush1.msra.mxu0 0.0
    %230 = vmatprep.subr.mxu0 0.0
    %231 = vmatpush1.msra.mxu0 0.0
    %232 = vmatprep.subr.mxu0 0.0
    %233 = vmatpush1.msra.mxu0 0.0
    %234 = vmatprep.subr.mxu0 0.0
    %235 = vmatpush1.msra.mxu0 0.0
    %236 = vmatprep.subr.mxu0 0.0
    %237 = vmatpush1.msra.mxu0 0.0
    %238 = vmatprep.subr.mxu0 0.0
    %239 = vmatpush1.msra.mxu0 0.0
    %240 = vmatprep.subr.mxu0 0.0
    %241 = vmatpush1.msra.mxu0 0.0
    %242 = vmatprep.subr.mxu0 0.0
    %243 = vmatpush1.msra.mxu0 0.0
    %244 = vmatprep.subr.mxu0 0.0
    %245 = vmatpush1.msra.mxu0 0.0
    %246 = vmatprep.subr.mxu0 0.0
    %247 = vmatpush1.msra.mxu0 0.0
    %248 = vmatprep.subr.mxu0 0.0
    %249 = vmatpush1.msra.mxu0 0.0
    %250 = vmatprep.subr.mxu0 0.0
    %251 = vmatpush1.msra.mxu0 0.0
    %252 = vmatprep.subr.mxu0 0.0
    %253 = vmatpush1.msra.mxu0 0.0
    %254 = vmatprep.subr.mxu0 0.0
    %255 = vmatpush1.msra.mxu0 0.0
    %256 = vmatprep.subr.mxu0 0.0
    %257 = vmatpush1.msra.mxu0 0.0
    %258 = vmatprep.subr.mxu0 0.0
    %259 = vmatpush1.msra.mxu0 0.0
    %260 = vmatprep.subr.mxu0 0.0
    %261 = vmatpush1.msra.mxu0 0.0
    %262 = vmatprep.subr.mxu0 0.0
    %263 = vmatpush1.msra.mxu0 0.0
    %264 = vmatprep.subr.mxu0 0.0
    %265 = vmatpush1.msra.mxu0 0.0
    %266 = vmatprep.subr.mxu0 0.0
    %267 = vmatpush1.msra.mxu0 0.0
    %268 = vmatprep.subr.mxu0 0.0
    %269 = vmatpush1.msra.mxu0 0.0
    %270 = vmatprep.subr.mxu0 0.0
    %271 = vmatpush1.msra.mxu0 0.0
    %272 = vmatprep.subr.mxu0 0.0
    %273 = vmatpush1.msra.mxu0 0.0
    %274 = vmatprep.subr.mxu0 0.0
    %275 = vmatpush1.msra.mxu0 0.0
    %276 = vmatprep.subr.mxu0 0.0
    %277 = vmatpush1.msra.mxu0 0.0
    %278 = vmatprep.subr.mxu0 0.0
    %279 = vmatpush1.msra.mxu0 0.0
    %280 = vmatprep.mubr.f32.mxu0 0.0
    %281 = vmatmul.mubr.f32.gmra.mrb[0].mxu0 %v193
    %v282 = vpop.f32.mrb[0].mxu0
    %v283 = vadd.f32 %v154, %v282
    %v284 = vpop.f32.mrb[0].mxu0
    %v285 = vadd.f32 %v154, %v284
    %286 = vmatprep.mubr.f32.mxu0 0.0
    %287 = vmatmul.mubr.f32.gmra.mrb[0].mxu0 %v196
    %v288 = vpop.f32.mrb[0].mxu0
    %v289 = vadd.f32 %v159, %v288
    %v290 = vpop.f32.mrb[0].mxu0
    %v291 = vadd.f32 %v159, %v290
    %292 = vmatprep.mubr.f32.mxu0 0.0
    %293 = vmatmul.mubr.f32.gmra.mrb[0].mxu0 %v199
    %v294 = vpop.f32.mrb[0].mxu0
    %v295 = vadd.f32 %v164, %v294
    %v296 = vpop.f32.mrb[0].mxu0
    %v297 = vadd.f32 %v164, %v296
    %298 = vmatprep.mubr.f32.mxu0 0.0
    %299 = vmatmul.mubr.f32.gmra.mrb[0].mxu0 %v202
    %v300 = vpop.f32.mrb[0].mxu0
    %v301 = vadd.f32 %v169, %v300
    %v302 = vpop.f32.mrb[0].mxu0
    %v303 = vadd.f32 %v169, %v302
    %304 = vmatprep.mubr.f32.mxu0 0.0
    %305 = vmatmul.mubr.f32.gmra.mrb[0].mxu0 %v205
    %v306 = vpop.f32.mrb[0].mxu0
    %v307 = vadd.f32 %v174, %v306
    %v308 = vpop.f32.mrb[0].mxu0
    %v309 = vadd.f32 %v174, %v308
    %310 = vmatprep.mubr.f32.mxu0 0.0
    %311 = vmatmul.mubr.f32.gmra.mrb[0].mxu0 %v208
    %v312 = vpop.f32.mrb[0].mxu0
    %v313 = vadd.f32 %v179, %v312
    %v314 = vpop.f32.mrb[0].mxu0
    %v315 = vadd.f32 %v179, %v314
    %316 = vmatprep.mubr.f32.mxu0 0.0
    %317 = vmatmul.mubr.f32.gmra.mrb[0].mxu0 %v211
    %v318 = vpop.f32.mrb[0].mxu0
    %v319 = vadd.f32 %v184, %v318
    %v320 = vpop.f32.mrb[0].mxu0
    %v321 = vadd.f32 %v184, %v320
    %322 = vmatprep.mubr.f32.mxu0 0.0
    %323 = vmatmul.mubr.f32.gmra.mrb[0].mxu0 %v214
    %v324 = vpop.f32.mrb[0].mxu0
    %v325 = vadd.f32 %v189, %v324
    %v326 = vpop.f32.mrb[0].mxu0
    %v327 = vadd.f32 %v189, %v326
    %328 = vdwg.mxu0
    %v329 = vadd.f32 %v53, %v283
    %v330 = vadd.f32 %v54, %v285
    %v331 = vadd.f32 %v55, %v289
    %v332 = vadd.f32 %v56, %v291
    %v333 = vadd.f32 %v57, %v295
    %v334 = vadd.f32 %v58, %v297
    %v335 = vadd.f32 %v59, %v301
    %v336 = vadd.f32 %v60, %v303
    %v337 = vadd.f32 %v61, %v307
    %v338 = vadd.f32 %v62, %v309
    %v339 = vadd.f32 %v63, %v313
    %v340 = vadd.f32 %v64, %v315
    %v341 = vadd.f32 %v65, %v319
    %v342 = vadd.f32 %v66, %v321
    %v343 = vadd.f32 %v67, %v325
    %v344 = vadd.f32 %v68, %v327
    %345 = vst [vmem:[#allocation5] sm:$0xff] %v329
    %346 = vst [vmem:[#allocation5 + $0x8] sm:$0xff] %v330
    %347 = vst [vmem:[#allocation5 + $0x10] sm:$0xff] %v331
    %348 = vst [vmem:[#allocation5 + $0x18] sm:$0xff] %v332
    %349 = vst [vmem:[#allocation5 + $0x20] sm:$0xff] %v333
    %350 = vst [vmem:[#allocation5 + $0x28] sm:$0xff] %v334
    %351 = vst [vmem:[#allocation5 + $0x30] sm:$0xff] %v335
    %352 = vst [vmem:[#allocation5 + $0x38] sm:$0xff] %v336
    %353 = vst [vmem:[#allocation5 + $0x40] sm:$0xff] %v337
    %354 = vst [vmem:[#allocation5 + $0x48] sm:$0xff] %v338
    %355 = vst [vmem:[#allocation5 + $0x50] sm:$0xff] %v339
    %356 = vst [vmem:[#allocation5 + $0x58] sm:$0xff] %v340
    %357 = vst [vmem:[#allocation5 + $0x60] sm:$0xff] %v341
    %358 = vst [vmem:[#allocation5 + $0x68] sm:$0xff] %v342
    %359 = vst [vmem:[#allocation5 + $0x70] sm:$0xff] %v343
    %360 = vst [vmem:[#allocation5 + $0x78] sm:$0xff] %v344
    %s361 = scalar_lea.vmem [#allocation2], 128
    %v362 = vld [vmem:[%s361] sm:$0xff]
    %v363 = vld [vmem:[%s361 + $0x8] sm:$0xff]
    %v364 = vld [vmem:[%s361 + $0x10] sm:$0xff]
    %v365 = vld [vmem:[%s361 + $0x18] sm:$0xff]
    %v366 = vld [vmem:[%s361 + $0x20] sm:$0xff]
    %v367 = vld [vmem:[%s361 + $0x28] sm:$0xff]
    %v368 = vld [vmem:[%s361 + $0x30] sm:$0xff]
    %v369 = vld [vmem:[%s361 + $0x38] sm:$0xff]
    %v370 = vld [vmem:[%s361 + $0x40] sm:$0xff]
    %v371 = vld [vmem:[%s361 + $0x48] sm:$0xff]
    %v372 = vld [vmem:[%s361 + $0x50] sm:$0xff]
    %v373 = vld [vmem:[%s361 + $0x58] sm:$0xff]
    %v374 = vld [vmem:[%s361 + $0x60] sm:$0xff]
    %v375 = vld [vmem:[%s361 + $0x68] sm:$0xff]
    %v376 = vld [vmem:[%s361 + $0x70] sm:$0xff]
    %v377 = vld [vmem:[%s361 + $0x78] sm:$0xff]
    %378 = vmatprep.subr.mxu0 %v363
    %379 = vmatpush1.msra.mxu0 %v362
    %380 = vmatprep.subr.mxu0 %v365
    %381 = vmatpush1.msra.mxu0 %v364
    %382 = vmatprep.subr.mxu0 %v367
    %383 = vmatpush1.msra.mxu0 %v366
    %384 = vmatprep.subr.mxu0 %v369
    %385 = vmatpush1.msra.mxu0 %v368
    %386 = vmatprep.subr.mxu0 %v371
    %387 = vmatpush1.msra.mxu0 %v370
    %388 = vmatprep.subr.mxu0 %v373
    %389 = vmatpush1.msra.mxu0 %v372
    %390 = vmatprep.subr.mxu0 %v375
    %391 = vmatpush1.msra.mxu0 %v374
    %392 = vmatprep.subr.mxu0 %v377
    %393 = vmatpush1.msra.mxu0 %v376
    %394 = vmatprep.subr.mxu0 0.0
    %395 = vmatpush1.msra.mxu0 0.0
    %396 = vmatprep.subr.mxu0 0.0
    %397 = vmatpush1.msra.mxu0 0.0
    %398 = vmatprep.subr.mxu0 0.0
    %399 = vmatpush1.msra.mxu0 0.0
    %400 = vmatprep.subr.mxu0 0.0
    %401 = vmatpush1.msra.mxu0 0.0
    %402 = vmatprep.subr.mxu0 0.0
    %403 = vmatpush1.msra.mxu0 0.0
    %404 = vmatprep.subr.mxu0 0.0
    %405 = vmatpush1.msra.mxu0 0.0
    %406 = vmatprep.subr.mxu0 0.0
    %407 = vmatpush1.msra.mxu0 0.0
    %408 = vmatprep.subr.mxu0 0.0
    %409 = vmatpush1.msra.mxu0 0.0
    %410 = vmatprep.subr.mxu0 0.0
    %411 = vmatpush1.msra.mxu0 0.0
    %412 = vmatprep.subr.mxu0 0.0
    %413 = vmatpush1.msra.mxu0 0.0
    %414 = vmatprep.subr.mxu0 0.0
    %415 = vmatpush1.msra.mxu0 0.0
    %416 = vmatprep.subr.mxu0 0.0
    %417 = vmatpush1.msra.mxu0 0.0
    %418 = vmatprep.subr.mxu0 0.0
    %419 = vmatpush1.msra.mxu0 0.0
    %420 = vmatprep.subr.mxu0 0.0
    %421 = vmatpush1.msra.mxu0 0.0
    %422 = vmatprep.subr.mxu0 0.0
    %423 = vmatpush1.msra.mxu0 0.0
    %424 = vmatprep.subr.mxu0 0.0
    %425 = vmatpush1.msra.mxu0 0.0
    %426 = vmatprep.subr.mxu0 0.0
    %427 = vmatpush1.msra.mxu0 0.0
    %428 = vmatprep.subr.mxu0 0.0
    %429 = vmatpush1.msra.mxu0 0.0
    %430 = vmatprep.subr.mxu0 0.0
    %431 = vmatpush1.msra.mxu0 0.0
    %432 = vmatprep.subr.mxu0 0.0
    %433 = vmatpush1.msra.mxu0 0.0
    %434 = vmatprep.subr.mxu0 0.0
    %435 = vmatpush1.msra.mxu0 0.0
    %436 = vmatprep.subr.mxu0 0.0
    %437 = vmatpush1.msra.mxu0 0.0
    %438 = vmatprep.subr.mxu0 0.0
    %439 = vmatpush1.msra.mxu0 0.0
    %440 = vmatprep.subr.mxu0 0.0
    %441 = vmatpush1.msra.mxu0 0.0
    %442 = vmatprep.mubr.f32.mxu0 0.0
    %443 = vmatmul.mubr.f32.gmra.mrb[0].mxu0 %v76
    %v444 = vpop.f32.mrb[0].mxu0
    %v445 = vadd.f32 %v72, %v444
    %v446 = vpop.f32.mrb[0].mxu0
    %v447 = vadd.f32 %v72, %v446
    %448 = vdwg.mxu0
    %v449 = vmax.f32 %v445, 0.0
    %v450 = vmax.f32 %v447, 0.0
    %451 = vmatprep.subr.mxu0 %v450
    %452 = vmatpush1.msra.mxu0 %v449
    %453 = vmatprep.subr.mxu0 0.0
    %454 = vmatpush1.msra.mxu0 0.0
    %455 = vmatprep.subr.mxu0 0.0
    %456 = vmatpush1.msra.mxu0 0.0
    %457 = vmatprep.subr.mxu0 0.0
    %458 = vmatpush1.msra.mxu0 0.0
    %459 = vmatprep.subr.mxu0 0.0
    %460 = vmatpush1.msra.mxu0 0.0
    %461 = vmatprep.subr.mxu0 0.0
    %462 = vmatpush1.msra.mxu0 0.0
    %463 = vmatprep.subr.mxu0 0.0
    %464 = vmatpush1.msra.mxu0 0.0
    %465 = vmatprep.subr.mxu0 0.0
    %466 = vmatpush1.msra.mxu0 0.0
    %467 = vmatprep.subr.mxu0 0.0
    %468 = vmatpush1.msra.mxu0 0.0
    %469 = vmatprep.subr.mxu0 0.0
    %470 = vmatpush1.msra.mxu0 0.0
    %471 = vmatprep.subr.mxu0 0.0
    %472 = vmatpush1.msra.mxu0 0.0
    %473 = vmatprep.subr.mxu0 0.0
    %474 = vmatpush1.msra.mxu0 0.0
    %475 = vmatprep.subr.mxu0 0.0
    %476 = vmatpush1.msra.mxu0 0.0
    %477 = vmatprep.subr.mxu0 0.0
    %478 = vmatpush1.msra.mxu0 0.0
    %479 = vmatprep.subr.mxu0 0.0
    %480 = vmatpush1.msra.mxu0 0.0
    %481 = vmatprep.subr.mxu0 0.0
    %482 = vmatpush1.msra.mxu0 0.0
    %483 = vmatprep.subr.mxu0 0.0
    %484 = vmatpush1.msra.mxu0 0.0
    %485 = vmatprep.subr.mxu0 0.0
    %486 = vmatpush1.msra.mxu0 0.0
    %487 = vmatprep.subr.mxu0 0.0
    %488 = vmatpush1.msra.mxu0 0.0
    %489 = vmatprep.subr.mxu0 0.0
    %490 = vmatpush1.msra.mxu0 0.0
    %491 = vmatprep.subr.mxu0 0.0
    %492 = vmatpush1.msra.mxu0 0.0
    %493 = vmatprep.subr.mxu0 0.0
    %494 = vmatpush1.msra.mxu0 0.0
    %495 = vmatprep.subr.mxu0 0.0
    %496 = vmatpush1.msra.mxu0 0.0
    %497 = vmatprep.subr.mxu0 0.0
    %498 = vmatpush1.msra.mxu0 0.0
    %499 = vmatprep.subr.mxu0 0.0
    %500 = vmatpush1.msra.mxu0 0.0
    %501 = vmatprep.subr.mxu0 0.0
    %502 = vmatpush1.msra.mxu0 0.0
    %503 = vmatprep.subr.mxu0 0.0
    %504 = vmatpush1.msra.mxu0 0.0
    %505 = vmatprep.subr.mxu0 0.0
    %506 = vmatpush1.msra.mxu0 0.0
    %507 = vmatprep.subr.mxu0 0.0
    %508 = vmatpush1.msra.mxu0 0.0
    %509 = vmatprep.subr.mxu0 0.0
    %510 = vmatpush1.msra.mxu0 0.0
    %511 = vmatprep.subr.mxu0 0.0
    %512 = vmatpush1.msra.mxu0 0.0
    %513 = vmatprep.subr.mxu0 0.0
    %514 = vmatpush1.msra.mxu0 0.0
    %515 = vmatprep.mubr.f32.mxu0 0.0
    %516 = vmatmul.mubr.f32.gmra.mrb[0].mxu0 %v193
    %v517 = vpop.f32.mrb[0].mxu0
    %v518 = vadd.f32 %v154, %v517
    %v519 = vpop.f32.mrb[0].mxu0
    %v520 = vadd.f32 %v154, %v519
    %521 = vmatprep.mubr.f32.mxu0 0.0
    %522 = vmatmul.mubr.f32.gmra.mrb[0].mxu0 %v196
    %v523 = vpop.f32.mrb[0].mxu0
    %v524 = vadd.f32 %v159, %v523
    %v525 = vpop.f32.mrb[0].mxu0
    %v526 = vadd.f32 %v159, %v525
    %527 = vmatprep.mubr.f32.mxu0 0.0
    %528 = vmatmul.mubr.f32.gmra.mrb[0].mxu0 %v199
    %v529 = vpop.f32.mrb[0].mxu0
    %v530 = vadd.f32 %v164, %v529
    %v531 = vpop.f32.mrb[0].mxu0
    %v532 = vadd.f32 %v164, %v531
    %533 = vmatprep.mubr.f32.mxu0 0.0
    %534 = vmatmul.mubr.f32.gmra.mrb[0].mxu0 %v202
    %v535 = vpop.f32.mrb[0].mxu0
    %v536 = vadd.f32 %v169, %v535
    %v537 = vpop.f32.mrb[0].mxu0
    %v538 = vadd.f32 %v169, %v537
    %539 = vmatprep.mubr.f32.mxu0 0.0
    %540 = vmatmul.mubr.f32.gmra.mrb[0].mxu0 %v205
    %v541 = vpop.f32.mrb[0].mxu0
    %v542 = vadd.f32 %v174, %v541
    %v543 = vpop.f32.mrb[0].mxu0
    %v544 = vadd.f32 %v174, %v543
    %545 = vmatprep.mubr.f32.mxu0 0.0
    %546 = vmatmul.mubr.f32.gmra.mrb[0].mxu0 %v208
    %v547 = vpop.f32.mrb[0].mxu0
    %v548 = vadd.f32 %v179, %v547
    %v549 = vpop.f32.mrb[0].mxu0
    %v550 = vadd.f32 %v179, %v549
    %551 = vmatprep.mubr.f32.mxu0 0.0
    %552 = vmatmul.mubr.f32.gmra.mrb[0].mxu0 %v211
    %v553 = vpop.f32.mrb[0].mxu0
    %v554 = vadd.f32 %v184, %v553
    %v555 = vpop.f32.mrb[0].mxu0
    %v556 = vadd.f32 %v184, %v555
    %557 = vmatprep.mubr.f32.mxu0 0.0
    %558 = vmatmul.mubr.f32.gmra.mrb[0].mxu0 %v214
    %v559 = vpop.f32.mrb[0].mxu0
    %v560 = vadd.f32 %v189, %v559
    %v561 = vpop.f32.mrb[0].mxu0
    %v562 = vadd.f32 %v189, %v561
    %563 = vdwg.mxu0
    %v564 = vadd.f32 %v362, %v518
    %v565 = vadd.f32 %v363, %v520
    %v566 = vadd.f32 %v364, %v524
    %v567 = vadd.f32 %v365, %v526
    %v568 = vadd.f32 %v366, %v530
    %v569 = vadd.f32 %v367, %v532
    %v570 = vadd.f32 %v368, %v536
    %v571 = vadd.f32 %v369, %v538
    %v572 = vadd.f32 %v370, %v542
    %v573 = vadd.f32 %v371, %v544
    %v574 = vadd.f32 %v372, %v548
    %v575 = vadd.f32 %v373, %v550
    %v576 = vadd.f32 %v374, %v554
    %v577 = vadd.f32 %v375, %v556
    %v578 = vadd.f32 %v376, %v560
    %v579 = vadd.f32 %v377, %v562
    %s580 = scalar_lea.vmem [#allocation5], 128
    %581 = vst [vmem:[%s580] sm:$0xff] %v564
    %582 = vst [vmem:[%s580 + $0x8] sm:$0xff] %v565
    %583 = vst [vmem:[%s580 + $0x10] sm:$0xff] %v566
    %584 = vst [vmem:[%s580 + $0x18] sm:$0xff] %v567
    %585 = vst [vmem:[%s580 + $0x20] sm:$0xff] %v568
    %586 = vst [vmem:[%s580 + $0x28] sm:$0xff] %v569
    %587 = vst [vmem:[%s580 + $0x30] sm:$0xff] %v570
    %588 = vst [vmem:[%s580 + $0x38] sm:$0xff] %v571
    %589 = vst [vmem:[%s580 + $0x40] sm:$0xff] %v572
    %590 = vst [vmem:[%s580 + $0x48] sm:$0xff] %v573
    %591 = vst [vmem:[%s580 + $0x50] sm:$0xff] %v574
    %592 = vst [vmem:[%s580 + $0x58] sm:$0xff] %v575
    %593 = vst [vmem:[%s580 + $0x60] sm:$0xff] %v576
    %594 = vst [vmem:[%s580 + $0x68] sm:$0xff] %v577
    %595 = vst [vmem:[%s580 + $0x70] sm:$0xff] %v578
    %596 = vst [vmem:[%s580 + $0x78] sm:$0xff] %v579
    // Predicated region
    $region26: #{tpu_custom_call.1} parent=1 // pred_check
      _
    $region27: #{tpu_custom_call.1} parent=1 // pred_check_branch
      %598 = sbr.rel (0) target = $region29
    $region28: #{tpu_custom_call.1} parent=1 // pred_region
      %s600 = ssub.s32 4096, 4096
      %601 = vsyncadd [#allocation4], %s600
      %s602 = sshll.u32 [#allocation5], 4
      %s603 = int_to_ptr.vmem [resolvable:$true] %s602
      %608 = dma.vmem_to_hbm [thread:$0]  %s603, 4096, %s5, [#allocation4], 256, 256, 16
    $region29: #{tpu_custom_call.1} parent=1 // pred_fallthru
      _
    // Predicated region
    $region30: #{tpu_custom_call.1} parent=1 // pred_check
      _
    $region31: #{tpu_custom_call.1} parent=1 // pred_check_branch
      %610 = sbr.rel (0) target = $region33
    $region32: #{tpu_custom_call.1} parent=1 // pred_region
      %611 = dma.done [#allocation4], 4096
    $region33: #{tpu_custom_call.1} parent=1 // pred_fallthru
      _
    %612 = vsyncpa [#allocation3], 1
    %613 = vsyncpa [#allocation4], 1

</llo_original>
